<compile_context>
chip_gen: v5e
topology: v5e:2x2
jax: 0.10.0
libtpu: 0.0.40
codegen_flags: <defaults>
</compile_context>

<pallas_src>
import math

import jax
import jax.numpy as jnp
from jax.experimental import pallas as pl
from jax.experimental.pallas import tpu as pltpu


def _autoencoder_kernel(
    x_ref,
    w1, b1, w2, b2, w3, b3,        # encoder: in -> 128 -> 64 -> 12
    w45, b45,                      # fused bottleneck: 12 -> 12 (Linear(12,3) o Linear(3,12))
    w6, b6, w7, b7, w8, b8,        # decoder tail: 12 -> 64 -> 128 -> in
    out_ref,
):
    def linear(h, w_ref, b_ref):
        # bf16 MXU matmul with f32 accumulation, f32 bias add.
        return (
            jnp.dot(h.astype(w_ref.dtype), w_ref[...],
                    preferred_element_type=jnp.float32)
            + b_ref[...]
        )

    h = x_ref[...]                                  # (TM, input_size) bf16 tile
    h = jnp.maximum(linear(h, w1, b1), 0.0)
    h = jnp.maximum(linear(h, w2, b2), 0.0)
    h = jnp.maximum(linear(h, w3, b3), 0.0)
    h = jnp.maximum(linear(h, w45, b45), 0.0)       # fused bottleneck + ReLU
    h = jnp.maximum(linear(h, w6, b6), 0.0)
    h = jnp.maximum(linear(h, w7, b7), 0.0)
    h = linear(h, w8, b8)
    # Sigmoid: exp on the EUP, approximate reciprocal on the EUP (no VALU divide).
    h = pl.reciprocal(1.0 + jnp.exp(-h), approx=True)
    out_ref[...] = h.astype(out_ref.dtype)


def prepare_kernel_params(params):
    """Fuse the activation-free bottleneck pair and cast weights to bf16.

    params: list of 8 (w, b) f32 pairs, w in (in, out) layout (torch transpose).
    Returns a flat list [w1,b1,w2,b2,w3,b3,w45,b45,w6,b6,w7,b7,w8,b8] with
    bf16 weights and f32 biases.
    """
    (w1, bb1), (w2, bb2), (w3, bb3), (w4, bb4), \
        (w5, bb5), (w6, bb6), (w7, bb7), (w8, bb8) = params
    # Linear(12,3) followed (no activation) by Linear(3,12): exact fusion in f32.
    w45 = w4 @ w5                    # (12, 12)
    b45 = bb4 @ w5 + bb5             # (1, 12)
    fused = [(w1, bb1), (w2, bb2), (w3, bb3), (w45, b45),
             (w6, bb6), (w7, bb7), (w8, bb8)]
    flat = []
    for w, b in fused:
        flat.append(w.astype(jnp.bfloat16))
        flat.append(b.astype(jnp.float32))
    return flat


def _pick_block_m(B, target):
    """Largest multiple-of-8 divisor of B not exceeding target (or B itself)."""
    if B <= target:
        return B
    for tm in range(target, 0, -1):
        if B % tm == 0 and tm % 8 == 0:
            return tm
    return B


def autoencoder_forward(x, params, *, block_m=256):
    """x: (B, ...) -> flattened to (B, input_size). Returns (B, input_size) f32."""
    B = x.shape[0]
    x2d = x.reshape(B, -1)
    input_size = x2d.shape[1]
    x_bf16 = x2d.astype(jnp.bfloat16)

    kparams = prepare_kernel_params(params)

    tm = _pick_block_m(B, block_m)
    grid = (B // tm,)

    x_spec = pl.BlockSpec((tm, input_size), lambda i: (i, 0))
    out_spec = pl.BlockSpec((tm, input_size), lambda i: (i, 0))
    # Weights/biases: whole array as one block, constant index_map -> fetched
    # once, VMEM-resident across all batch-tile iterations.
    w_specs = [pl.BlockSpec(p.shape, lambda i: (0, 0)) for p in kparams]

    weight_bytes = int(sum(int(p.size) * p.dtype.itemsize for p in kparams))
    layer_flops = int(sum(int(kparams[2 * i].shape[0]) * int(kparams[2 * i].shape[1])
                          for i in range(len(kparams) // 2)))
    cost = pl.CostEstimate(
        flops=2 * B * layer_flops,
        transcendentals=B * input_size,                      # exp (+ approx recip)
        bytes_accessed=int(x_bf16.nbytes) + B * input_size * 4 + weight_bytes,
    )

    # Resident weights + double-buffered bf16 input / f32 output tiles, with
    # headroom; capped at 64 MiB so the same setting is legal on v7x.
    tile_bytes = 2 * tm * input_size * (2 + 4)
    vmem_limit = min(64 << 20, max(32 << 20, int(1.5 * (weight_bytes + tile_bytes))))

    out = pl.pallas_call(
        _autoencoder_kernel,
        out_shape=jax.ShapeDtypeStruct((B, input_size), jnp.float32),
        grid=grid,
        in_specs=[x_spec] + w_specs,
        out_specs=out_spec,
        compiler_params=pltpu.CompilerParams(
            dimension_semantics=("parallel",),
            vmem_limit_bytes=vmem_limit,
        ),
        cost_estimate=cost,
    )(x_bf16, *kparams)
    return out


def init_params(input_size, key):
    """Deterministic init matching torch.nn.Linear default (U(-1/sqrt(fan_in), +))."""
    dims = [
        (input_size, 128), (128, 64), (64, 12), (12, 3),     # encoder
        (3, 12), (12, 64), (64, 128), (128, input_size),     # decoder
    ]
    params = []
    for (fan_in, fan_out) in dims:
        key, kw, kb = jax.random.split(key, 3)
        bound = 1.0 / math.sqrt(fan_in)
        # Stored as (in, out): transpose of torch's (out, in) weight layout.
        w = jax.random.uniform(kw, (fan_in, fan_out), jnp.float32, -bound, bound)
        b = jax.random.uniform(kb, (1, fan_out), jnp.float32, -bound, bound)
        params.append((w, b))
    return params


def reference_forward(x, params):
    """Pure-JAX f32 reference matching the original (unfused) PyTorch module."""
    B = x.shape[0]
    h = x.reshape(B, -1).astype(jnp.float32)
    n = len(params)
    for i, (w, b) in enumerate(params):
        h = h @ w + b
        if i == n - 1:
            h = jax.nn.sigmoid(h)
        elif i != 3:          # layer index 3 is the bottleneck Linear (no ReLU)
            h = jnp.maximum(h, 0.0)
    return h


if __name__ == "__main__":
    key = jax.random.PRNGKey(0)
    k_x, k_p = jax.random.split(key)

    # Small example: batch=64, image 1x16x16 -> input_size = 256.
    # block_m=16 gives a 4-step batch grid so the tiled/pipelined path is exercised.
    B, C, H, W = 64, 1, 16, 16
    input_size = C * H * W
    x = jax.random.uniform(k_x, (B, C, H, W), jnp.float32)

    params = init_params(input_size, k_p)

    out = autoencoder_forward(x, params, block_m=16)
    out = jax.block_until_ready(out)

    ref = reference_forward(x, params)
    assert out.shape == (B, input_size), out.shape
    max_err = float(jnp.max(jnp.abs(out - ref)))
    # Kernel uses bf16 weights/activation streaming (f32 accumulation); the
    # reference is full f32, so allow a small absolute tolerance on the
    # sigmoid-bounded outputs.
    assert max_err < 2e-2, max_err

    print("KERNEL_OK")
</pallas_src>

<mosaic_0001>
module attributes {stable_mosaic.version = 11 : i64} {
  func.func @_autoencoder_kernel(%arg0: i32, %arg1: memref<16x256xbf16, #tpu.memory_space<vmem>>, %arg2: memref<256x128xbf16, #tpu.memory_space<vmem>>, %arg3: memref<1x128xf32, #tpu.memory_space<vmem>>, %arg4: memref<128x64xbf16, #tpu.memory_space<vmem>>, %arg5: memref<1x64xf32, #tpu.memory_space<vmem>>, %arg6: memref<64x12xbf16, #tpu.memory_space<vmem>>, %arg7: memref<1x12xf32, #tpu.memory_space<vmem>>, %arg8: memref<12x12xbf16, #tpu.memory_space<vmem>>, %arg9: memref<1x12xf32, #tpu.memory_space<vmem>>, %arg10: memref<12x64xbf16, #tpu.memory_space<vmem>>, %arg11: memref<1x64xf32, #tpu.memory_space<vmem>>, %arg12: memref<64x128xbf16, #tpu.memory_space<vmem>>, %arg13: memref<1x128xf32, #tpu.memory_space<vmem>>, %arg14: memref<128x256xbf16, #tpu.memory_space<vmem>>, %arg15: memref<1x256xf32, #tpu.memory_space<vmem>>, %arg16: memref<16x256xf32, #tpu.memory_space<vmem>>) attributes {dimension_semantics = [#tpu.dimension_semantics<parallel>], iteration_bounds = array<i64: 4>, scalar_prefetch = 0 : i64, scratch_operands = 0 : i64, tpu.core_type = #tpu.core_type<tc>, window_params = [{transform_indices = @transform_0, window_bounds = array<i64: 16, 256>}, {pipeline_mode = #tpu.pipeline_mode<synchronous>, transform_indices = @transform_1, window_bounds = array<i64: 256, 128>}, {pipeline_mode = #tpu.pipeline_mode<synchronous>, transform_indices = @transform_2, window_bounds = array<i64: 1, 128>}, {pipeline_mode = #tpu.pipeline_mode<synchronous>, transform_indices = @transform_3, window_bounds = array<i64: 128, 64>}, {pipeline_mode = #tpu.pipeline_mode<synchronous>, transform_indices = @transform_4, window_bounds = array<i64: 1, 64>}, {pipeline_mode = #tpu.pipeline_mode<synchronous>, transform_indices = @transform_5, window_bounds = array<i64: 64, 12>}, {pipeline_mode = #tpu.pipeline_mode<synchronous>, transform_indices = @transform_6, window_bounds = array<i64: 1, 12>}, {pipeline_mode = #tpu.pipeline_mode<synchronous>, transform_indices = @transform_7, window_bounds = array<i64: 12, 12>}, {pipeline_mode = #tpu.pipeline_mode<synchronous>, transform_indices = @transform_8, window_bounds = array<i64: 1, 12>}, {pipeline_mode = #tpu.pipeline_mode<synchronous>, transform_indices = @transform_9, window_bounds = array<i64: 12, 64>}, {pipeline_mode = #tpu.pipeline_mode<synchronous>, transform_indices = @transform_10, window_bounds = array<i64: 1, 64>}, {pipeline_mode = #tpu.pipeline_mode<synchronous>, transform_indices = @transform_11, window_bounds = array<i64: 64, 128>}, {pipeline_mode = #tpu.pipeline_mode<synchronous>, transform_indices = @transform_12, window_bounds = array<i64: 1, 128>}, {pipeline_mode = #tpu.pipeline_mode<synchronous>, transform_indices = @transform_13, window_bounds = array<i64: 128, 256>}, {pipeline_mode = #tpu.pipeline_mode<synchronous>, transform_indices = @transform_14, window_bounds = array<i64: 1, 256>}, {transform_indices = @transform_15, window_bounds = array<i64: 16, 256>}]} {
    %c0 = arith.constant 0 : index
    %c0_0 = arith.constant 0 : index
    %0 = vector.load %arg1[%c0, %c0_0] : memref<16x256xbf16, #tpu.memory_space<vmem>>, vector<16x256xbf16>
    %c0_1 = arith.constant 0 : index
    %c0_2 = arith.constant 0 : index
    %1 = vector.load %arg2[%c0_1, %c0_2] : memref<256x128xbf16, #tpu.memory_space<vmem>>, vector<256x128xbf16>
    %cst = arith.constant dense<0.000000e+00> : vector<16x128xf32>
    %2 = tpu.matmul %0, %1, %cst {dimension_numbers = #tpu.dot_dimension_numbers<[1], [0], [0], [1], [0, 0, 1, 1], [], []>} : vector<16x256xbf16>, vector<256x128xbf16>, vector<16x128xf32> -> vector<16x128xf32>
    %c0_3 = arith.constant 0 : index
    %c0_4 = arith.constant 0 : index
    %3 = vector.load %arg3[%c0_3, %c0_4] : memref<1x128xf32, #tpu.memory_space<vmem>>, vector<1x128xf32>
    %4 = vector.broadcast %3 : vector<1x128xf32> to vector<16x128xf32>
    %5 = arith.addf %2, %4 : vector<16x128xf32>
    %cst_5 = arith.constant 0.000000e+00 : f32
    %6 = vector.broadcast %cst_5 : f32 to vector<16x128xf32>
    %7 = arith.maximumf %5, %6 : vector<16x128xf32>
    %8 = arith.truncf %7 : vector<16x128xf32> to vector<16x128xbf16>
    %c0_6 = arith.constant 0 : index
    %c0_7 = arith.constant 0 : index
    %9 = vector.load %arg4[%c0_6, %c0_7] : memref<128x64xbf16, #tpu.memory_space<vmem>>, vector<128x64xbf16>
    %cst_8 = arith.constant dense<0.000000e+00> : vector<16x64xf32>
    %10 = tpu.matmul %8, %9, %cst_8 {dimension_numbers = #tpu.dot_dimension_numbers<[1], [0], [0], [1], [0, 0, 1, 1], [], []>} : vector<16x128xbf16>, vector<128x64xbf16>, vector<16x64xf32> -> vector<16x64xf32>
    %c0_9 = arith.constant 0 : index
    %c0_10 = arith.constant 0 : index
    %11 = vector.load %arg5[%c0_9, %c0_10] : memref<1x64xf32, #tpu.memory_space<vmem>>, vector<1x64xf32>
    %12 = vector.broadcast %11 : vector<1x64xf32> to vector<16x64xf32>
    %13 = arith.addf %10, %12 : vector<16x64xf32>
    %cst_11 = arith.constant 0.000000e+00 : f32
    %14 = vector.broadcast %cst_11 : f32 to vector<16x64xf32>
    %15 = arith.maximumf %13, %14 : vector<16x64xf32>
    %16 = arith.truncf %15 : vector<16x64xf32> to vector<16x64xbf16>
    %c0_12 = arith.constant 0 : index
    %c0_13 = arith.constant 0 : index
    %17 = vector.load %arg6[%c0_12, %c0_13] : memref<64x12xbf16, #tpu.memory_space<vmem>>, vector<64x12xbf16>
    %cst_14 = arith.constant dense<0.000000e+00> : vector<16x12xf32>
    %18 = tpu.matmul %16, %17, %cst_14 {dimension_numbers = #tpu.dot_dimension_numbers<[1], [0], [0], [1], [0, 0, 1, 1], [], []>} : vector<16x64xbf16>, vector<64x12xbf16>, vector<16x12xf32> -> vector<16x12xf32>
    %c0_15 = arith.constant 0 : index
    %c0_16 = arith.constant 0 : index
    %19 = vector.load %arg7[%c0_15, %c0_16] : memref<1x12xf32, #tpu.memory_space<vmem>>, vector<1x12xf32>
    %20 = vector.broadcast %19 : vector<1x12xf32> to vector<16x12xf32>
    %21 = arith.addf %18, %20 : vector<16x12xf32>
    %cst_17 = arith.constant 0.000000e+00 : f32
    %22 = vector.broadcast %cst_17 : f32 to vector<16x12xf32>
    %23 = arith.maximumf %21, %22 : vector<16x12xf32>
    %24 = arith.truncf %23 : vector<16x12xf32> to vector<16x12xbf16>
    %c0_18 = arith.constant 0 : index
    %c0_19 = arith.constant 0 : index
    %25 = vector.load %arg8[%c0_18, %c0_19] : memref<12x12xbf16, #tpu.memory_space<vmem>>, vector<12x12xbf16>
    %cst_20 = arith.constant dense<0.000000e+00> : vector<16x12xf32>
    %26 = tpu.matmul %24, %25, %cst_20 {dimension_numbers = #tpu.dot_dimension_numbers<[1], [0], [0], [1], [0, 0, 1, 1], [], []>} : vector<16x12xbf16>, vector<12x12xbf16>, vector<16x12xf32> -> vector<16x12xf32>
    %c0_21 = arith.constant 0 : index
    %c0_22 = arith.constant 0 : index
    %27 = vector.load %arg9[%c0_21, %c0_22] : memref<1x12xf32, #tpu.memory_space<vmem>>, vector<1x12xf32>
    %28 = vector.broadcast %27 : vector<1x12xf32> to vector<16x12xf32>
    %29 = arith.addf %26, %28 : vector<16x12xf32>
    %cst_23 = arith.constant 0.000000e+00 : f32
    %30 = vector.broadcast %cst_23 : f32 to vector<16x12xf32>
    %31 = arith.maximumf %29, %30 : vector<16x12xf32>
    %32 = arith.truncf %31 : vector<16x12xf32> to vector<16x12xbf16>
    %c0_24 = arith.constant 0 : index
    %c0_25 = arith.constant 0 : index
    %33 = vector.load %arg10[%c0_24, %c0_25] : memref<12x64xbf16, #tpu.memory_space<vmem>>, vector<12x64xbf16>
    %cst_26 = arith.constant dense<0.000000e+00> : vector<16x64xf32>
    %34 = tpu.matmul %32, %33, %cst_26 {dimension_numbers = #tpu.dot_dimension_numbers<[1], [0], [0], [1], [0, 0, 1, 1], [], []>} : vector<16x12xbf16>, vector<12x64xbf16>, vector<16x64xf32> -> vector<16x64xf32>
    %c0_27 = arith.constant 0 : index
    %c0_28 = arith.constant 0 : index
    %35 = vector.load %arg11[%c0_27, %c0_28] : memref<1x64xf32, #tpu.memory_space<vmem>>, vector<1x64xf32>
    %36 = vector.broadcast %35 : vector<1x64xf32> to vector<16x64xf32>
    %37 = arith.addf %34, %36 : vector<16x64xf32>
    %cst_29 = arith.constant 0.000000e+00 : f32
    %38 = vector.broadcast %cst_29 : f32 to vector<16x64xf32>
    %39 = arith.maximumf %37, %38 : vector<16x64xf32>
    %40 = arith.truncf %39 : vector<16x64xf32> to vector<16x64xbf16>
    %c0_30 = arith.constant 0 : index
    %c0_31 = arith.constant 0 : index
    %41 = vector.load %arg12[%c0_30, %c0_31] : memref<64x128xbf16, #tpu.memory_space<vmem>>, vector<64x128xbf16>
    %cst_32 = arith.constant dense<0.000000e+00> : vector<16x128xf32>
    %42 = tpu.matmul %40, %41, %cst_32 {dimension_numbers = #tpu.dot_dimension_numbers<[1], [0], [0], [1], [0, 0, 1, 1], [], []>} : vector<16x64xbf16>, vector<64x128xbf16>, vector<16x128xf32> -> vector<16x128xf32>
    %c0_33 = arith.constant 0 : index
    %c0_34 = arith.constant 0 : index
    %43 = vector.load %arg13[%c0_33, %c0_34] : memref<1x128xf32, #tpu.memory_space<vmem>>, vector<1x128xf32>
    %44 = vector.broadcast %43 : vector<1x128xf32> to vector<16x128xf32>
    %45 = arith.addf %42, %44 : vector<16x128xf32>
    %cst_35 = arith.constant 0.000000e+00 : f32
    %46 = vector.broadcast %cst_35 : f32 to vector<16x128xf32>
    %47 = arith.maximumf %45, %46 : vector<16x128xf32>
    %48 = arith.truncf %47 : vector<16x128xf32> to vector<16x128xbf16>
    %c0_36 = arith.constant 0 : index
    %c0_37 = arith.constant 0 : index
    %49 = vector.load %arg14[%c0_36, %c0_37] : memref<128x256xbf16, #tpu.memory_space<vmem>>, vector<128x256xbf16>
    %cst_38 = arith.constant dense<0.000000e+00> : vector<16x256xf32>
    %50 = tpu.matmul %48, %49, %cst_38 {dimension_numbers = #tpu.dot_dimension_numbers<[1], [0], [0], [1], [0, 0, 1, 1], [], []>} : vector<16x128xbf16>, vector<128x256xbf16>, vector<16x256xf32> -> vector<16x256xf32>
    %c0_39 = arith.constant 0 : index
    %c0_40 = arith.constant 0 : index
    %51 = vector.load %arg15[%c0_39, %c0_40] : memref<1x256xf32, #tpu.memory_space<vmem>>, vector<1x256xf32>
    %52 = vector.broadcast %51 : vector<1x256xf32> to vector<16x256xf32>
    %53 = arith.addf %50, %52 : vector<16x256xf32>
    %cst_41 = arith.constant 0.000000e+00 : f32
    %54 = vector.broadcast %cst_41 : f32 to vector<16x256xf32>
    %55 = arith.subf %54, %53 : vector<16x256xf32>
    %56 = math.exp %55 : vector<16x256xf32>
    %cst_42 = arith.constant 1.000000e+00 : f32
    %57 = vector.broadcast %cst_42 : f32 to vector<16x256xf32>
    %58 = arith.addf %57, %56 : vector<16x256xf32>
    %59 = tpu.reciprocal %58 {approx = true} : vector<16x256xf32> -> vector<16x256xf32>
    %c0_43 = arith.constant 0 : index
    %c0_44 = arith.constant 0 : index
    %60 = vector.load %arg16[%c0_43, %c0_44] : memref<16x256xf32, #tpu.memory_space<vmem>>, vector<16x256xf32>
    tpu.vector_store %arg16[%c0_43, %c0_44], %59 {strides = array<i32>} : memref<16x256xf32, #tpu.memory_space<vmem>>, vector<16x256xf32>,
    return
  }
  func.func @transform_0(%arg0: i32) -> (i32, i32) {
    %c0_i32 = arith.constant 0 : i32
    %c0_i32_0 = arith.constant 0 : i32
    return %arg0, %c0_i32 : i32, i32
  }
  func.func @transform_1(%arg0: i32) -> (i32, i32) {
    %c0_i32 = arith.constant 0 : i32
    %c0_i32_0 = arith.constant 0 : i32
    %c0_i32_1 = arith.constant 0 : i32
    return %c0_i32, %c0_i32_0 : i32, i32
  }
  func.func @transform_2(%arg0: i32) -> (i32, i32) {
    %c0_i32 = arith.constant 0 : i32
    %c0_i32_0 = arith.constant 0 : i32
    %c0_i32_1 = arith.constant 0 : i32
    return %c0_i32, %c0_i32_0 : i32, i32
  }
  func.func @transform_3(%arg0: i32) -> (i32, i32) {
    %c0_i32 = arith.constant 0 : i32
    %c0_i32_0 = arith.constant 0 : i32
    %c0_i32_1 = arith.constant 0 : i32
    return %c0_i32, %c0_i32_0 : i32, i32
  }
  func.func @transform_4(%arg0: i32) -> (i32, i32) {
    %c0_i32 = arith.constant 0 : i32
    %c0_i32_0 = arith.constant 0 : i32
    %c0_i32_1 = arith.constant 0 : i32
    return %c0_i32, %c0_i32_0 : i32, i32
  }
  func.func @transform_5(%arg0: i32) -> (i32, i32) {
    %c0_i32 = arith.constant 0 : i32
    %c0_i32_0 = arith.constant 0 : i32
    %c0_i32_1 = arith.constant 0 : i32
    return %c0_i32, %c0_i32_0 : i32, i32
  }
  func.func @transform_6(%arg0: i32) -> (i32, i32) {
    %c0_i32 = arith.constant 0 : i32
    %c0_i32_0 = arith.constant 0 : i32
    %c0_i32_1 = arith.constant 0 : i32
    return %c0_i32, %c0_i32_0 : i32, i32
  }
  func.func @transform_7(%arg0: i32) -> (i32, i32) {
    %c0_i32 = arith.constant 0 : i32
    %c0_i32_0 = arith.constant 0 : i32
    %c0_i32_1 = arith.constant 0 : i32
    return %c0_i32, %c0_i32_0 : i32, i32
  }
  func.func @transform_8(%arg0: i32) -> (i32, i32) {
    %c0_i32 = arith.constant 0 : i32
    %c0_i32_0 = arith.constant 0 : i32
    %c0_i32_1 = arith.constant 0 : i32
    return %c0_i32, %c0_i32_0 : i32, i32
  }
  func.func @transform_9(%arg0: i32) -> (i32, i32) {
    %c0_i32 = arith.constant 0 : i32
    %c0_i32_0 = arith.constant 0 : i32
    %c0_i32_1 = arith.constant 0 : i32
    return %c0_i32, %c0_i32_0 : i32, i32
  }
  func.func @transform_10(%arg0: i32) -> (i32, i32) {
    %c0_i32 = arith.constant 0 : i32
    %c0_i32_0 = arith.constant 0 : i32
    %c0_i32_1 = arith.constant 0 : i32
    return %c0_i32, %c0_i32_0 : i32, i32
  }
  func.func @transform_11(%arg0: i32) -> (i32, i32) {
    %c0_i32 = arith.constant 0 : i32
    %c0_i32_0 = arith.constant 0 : i32
    %c0_i32_1 = arith.constant 0 : i32
    return %c0_i32, %c0_i32_0 : i32, i32
  }
  func.func @transform_12(%arg0: i32) -> (i32, i32) {
    %c0_i32 = arith.constant 0 : i32
    %c0_i32_0 = arith.constant 0 : i32
    %c0_i32_1 = arith.constant 0 : i32
    return %c0_i32, %c0_i32_0 : i32, i32
  }
  func.func @transform_13(%arg0: i32) -> (i32, i32) {
    %c0_i32 = arith.constant 0 : i32
    %c0_i32_0 = arith.constant 0 : i32
    %c0_i32_1 = arith.constant 0 : i32
    return %c0_i32, %c0_i32_0 : i32, i32
  }
  func.func @transform_14(%arg0: i32) -> (i32, i32) {
    %c0_i32 = arith.constant 0 : i32
    %c0_i32_0 = arith.constant 0 : i32
    %c0_i32_1 = arith.constant 0 : i32
    return %c0_i32, %c0_i32_0 : i32, i32
  }
  func.func @transform_15(%arg0: i32) -> (i32, i32) {
    %c0_i32 = arith.constant 0 : i32
    %c0_i32_0 = arith.constant 0 : i32
    return %arg0, %c0_i32 : i32, i32
  }
}

</mosaic_0001>

<llo_original>
// kernel: tpu_custom_call.1
$region0: #{tpu_custom_call.1}
  #allocation0 [shape = 'u32[]', space=smem, size = 0x4, offset = 0x4, fixed_abs, tag = 'smem constant byte address 0x4 - core index']
  #allocation1 [shape = 'u32[72,128]{1,0:T(1,128)}', space=vmem, size = 0x9000, scoped, tag = 'internal scratch']
  %s0 = inlined_call_operand.hbm [shape: bf16[64,256], index: 0, kind: input, shape index: {}]
  %s1 = inlined_call_operand.vmem [shape: bf16[256,128], index: 1, kind: input, shape index: {}]
  %s2 = inlined_call_operand.vmem [shape: f32[1,128], index: 2, kind: input, shape index: {}]
  %s3 = inlined_call_operand.vmem [shape: bf16[128,64], index: 3, kind: input, shape index: {}]
  %s4 = inlined_call_operand.hbm [shape: f32[1,64], index: 4, kind: input, shape index: {}]
  %s5 = inlined_call_operand.vmem [shape: bf16[64,12], index: 5, kind: input, shape index: {}]
  %s6 = inlined_call_operand.vmem [shape: f32[1,12], index: 6, kind: input, shape index: {}]
  %s7 = inlined_call_operand.vmem [shape: bf16[12,12], index: 7, kind: input, shape index: {}]
  %s8 = inlined_call_operand.vmem [shape: f32[1,12], index: 8, kind: input, shape index: {}]
  %s9 = inlined_call_operand.hbm [shape: bf16[12,64], index: 9, kind: input, shape index: {}]
  %s10 = inlined_call_operand.vmem [shape: f32[1,64], index: 10, kind: input, shape index: {}]
  %s11 = inlined_call_operand.hbm [shape: bf16[64,128], index: 11, kind: input, shape index: {}]
  %s12 = inlined_call_operand.vmem [shape: f32[1,128], index: 12, kind: input, shape index: {}]
  %s13 = inlined_call_operand.hbm [shape: bf16[128,256], index: 13, kind: input, shape index: {}]
  %s14 = inlined_call_operand.vmem [shape: f32[1,256], index: 14, kind: input, shape index: {}]
  %s15 = inlined_call_operand.hbm [shape: f32[64,256], index: 15, kind: output, shape index: {}]
  %s16 = sld [smem:[#allocation0]]
  $region113: #{tpu_custom_call.1} parent=0
    _
  %s18 = ssub.s32 1, %s16
  %s19 = scalar_select 0, %s18, %s16
  $region1: #{tpu_custom_call.1} parent=0
    #allocation2 [shape = 'u8[16384]{0}', space=vmem, size = 0x4000, scoped, tag = 'input window, operand 0']
    #allocation3 [shape = 's32[2]{0}', space=sflag, size = 0x8, scoped, tag = 'scoped memory for tpu_custom_call.1']
    #allocation4 [shape = 's32[2]{0}', space=sflag, size = 0x8, scoped, tag = 'scoped memory for tpu_custom_call.1']
    #allocation5 [shape = 'u8[512]{0}', space=vmem, size = 0x400, scoped, tag = 'input window, operand 4, single buffered']
    #allocation6 [shape = 's32[1]{0}', space=sflag, size = 0x4, scoped, tag = 'scoped memory for tpu_custom_call.1']
    #allocation7 [shape = 'u8[4096]{0}', space=vmem, size = 0x1000, scoped, tag = 'input window, operand 9, single buffered']
    #allocation8 [shape = 'u8[16384]{0}', space=vmem, size = 0x4000, scoped, tag = 'input window, operand 11, single buffered']
    #allocation9 [shape = 's32[1]{0}', space=sflag, size = 0x4, scoped, tag = 'scoped memory for tpu_custom_call.1']
    #allocation10 [shape = 'u8[65536]{0}', space=vmem, size = 0x10000, scoped, tag = 'input window, operand 13, single buffered']
    #allocation11 [shape = 'u8[32768]{0}', space=vmem, size = 0x8000, scoped, tag = 'output window, operand 0']
    %20 = vsyncpa [#allocation3], 0
    %s21 = scalar_lea.sflag [#allocation3], 1
    %22 = vsyncpa %s21, 0
    %23 = vsyncpa [#allocation6], 0
    %24 = vsyncpa [#allocation9], 0
    %25 = vsyncpa [#allocation4], 0
    %s26 = scalar_lea.sflag [#allocation4], 1
    %27 = vsyncpa %s26, 0
    loop: start=0, step=1, limit=6
    $region2: #{tpu_custom_call.1} parent=1 // loop_pre_header
      _
    $region3: #{tpu_custom_call.1} parent=1 // loop_header
      %s29 = sphi 0, %s33
      %p30 = scmp.ge.s32.totalorder %s29, 6
      %s39 = sphi 0, %s41
      %s42 = sphi 0, %s39
      %s43 = sphi 0, %s42
      %s59 = sphi 0, %s43
      %s63 = sphi 0, %s63
      %s65 = sphi 0, %s63
      %s66 = sphi 0, %s65
      %s80 = sphi 0, %s66
      %s84 = sphi 0, %s84
      %s86 = sphi 0, %s84
      %s87 = sphi 0, %s86
      %s101 = sphi 0, %s87
      %s105 = sphi 0, %s105
      %s107 = sphi 0, %s105
      %s108 = sphi 0, %s107
      %s122 = sphi 0, %s108
      %s126 = sphi 0, %s126
      %s128 = sphi 0, %s126
      %s129 = sphi 0, %s128
      %s143 = sphi 0, %s129
      %s147 = sphi 0, %s147
      %s149 = sphi 0, %s147
      %s150 = sphi 0, %s149
      %s164 = sphi 0, %s150
      %s168 = sphi 0, %s168
      %s170 = sphi 0, %s168
      %s171 = sphi 0, %s170
      %s185 = sphi 0, %s171
      %s189 = sphi 0, %s189
      %s191 = sphi 0, %s189
      %s192 = sphi 0, %s191
      %s206 = sphi 0, %s192
      %s210 = sphi 0, %s210
      %s212 = sphi 0, %s210
      %s213 = sphi 0, %s212
      %s227 = sphi 0, %s213
      %s231 = sphi 0, %s231
      %s233 = sphi 0, %s231
      %s234 = sphi 0, %s233
      %s248 = sphi 0, %s234
      %s252 = sphi 0, %s252
      %s254 = sphi 0, %s252
      %s255 = sphi 0, %s254
      %s269 = sphi 0, %s255
      %s273 = sphi 0, %s273
      %s275 = sphi 0, %s273
      %s276 = sphi 0, %s275
      %s290 = sphi 0, %s276
      %s294 = sphi 0, %s294
      %s296 = sphi 0, %s294
      %s297 = sphi 0, %s296
      %s311 = sphi 0, %s297
      %s315 = sphi 0, %s315
      %s317 = sphi 0, %s315
      %s318 = sphi 0, %s317
      %s332 = sphi 0, %s318
      %s336 = sphi 0, %s336
      %s338 = sphi 0, %s336
      %s339 = sphi 0, %s338
      %s353 = sphi 0, %s339
      %s359 = sphi 0, %s361
      %s362 = sphi 0, %s359
      %s363 = sphi 0, %s362
      %s379 = sphi 0, %s363
    $region4: #{tpu_custom_call.1} parent=1 // loop_header_branch
      %32 = sbr.rel (%p30) target = $region8
    $region5: #{tpu_custom_call.1} parent=1 // loop_body
      %s34 = ssub.s32 %s29, 1
      %s35 = ssub.s32 %s29, 2
      %s36 = sadd.s32 %s29, 1
      %s37 = ssub.s32 %s29, %s36
      %p38 = scmp.eq.s32.totalorder %s37, 0
      %s40 = sadd.s32 %s39, 1
      %s41 = scalar_select %p38, %s39, %s40
      %p44 = pneg %p38
      %p45 = scmp.eq.s32.totalorder %s29, 3
      %p46 = por %p44, %p45
      %p47 = scmp.ne.s32.totalorder %s39, %s42
      %p48 = scmp.eq.s32.totalorder %s29, 0
      %p49 = por %p47, %p48
      %p50 = scmp.ne.s32.totalorder %s39, %s42
      %p51 = scmp.eq.s32.totalorder %s34, 3
      %p52 = por %p50, %p51
      %p53 = scmp.ne.s32.totalorder %s42, %s43
      %p54 = scmp.eq.s32.totalorder %s34, 0
      %p55 = por %p53, %p54
      %p56 = scmp.ne.s32.totalorder %s42, %s43
      %p57 = scmp.eq.s32.totalorder %s35, 3
      %p58 = por %p56, %p57
      %p60 = scmp.ne.s32.totalorder %s43, %s59
      %p61 = scmp.eq.s32.totalorder %s35, 0
      %p62 = por %p60, %p61
      %s64 = sadd.s32 %s63, 1
      %p67 = scmp.eq.s32.totalorder %s29, 3
      %p68 = scmp.ne.s32.totalorder %s63, %s65
      %p69 = scmp.eq.s32.totalorder %s29, 0
      %p70 = por %p68, %p69
      %p71 = scmp.ne.s32.totalorder %s63, %s65
      %p72 = scmp.eq.s32.totalorder %s34, 3
      %p73 = por %p71, %p72
      %p74 = scmp.ne.s32.totalorder %s65, %s66
      %p75 = scmp.eq.s32.totalorder %s34, 0
      %p76 = por %p74, %p75
      %p77 = scmp.ne.s32.totalorder %s65, %s66
      %p78 = scmp.eq.s32.totalorder %s35, 3
      %p79 = por %p77, %p78
      %p81 = scmp.ne.s32.totalorder %s66, %s80
      %p82 = scmp.eq.s32.totalorder %s35, 0
      %p83 = por %p81, %p82
      %s85 = sadd.s32 %s84, 1
      %p88 = scmp.eq.s32.totalorder %s29, 3
      %p89 = scmp.ne.s32.totalorder %s84, %s86
      %p90 = scmp.eq.s32.totalorder %s29, 0
      %p91 = por %p89, %p90
      %p92 = scmp.ne.s32.totalorder %s84, %s86
      %p93 = scmp.eq.s32.totalorder %s34, 3
      %p94 = por %p92, %p93
      %p95 = scmp.ne.s32.totalorder %s86, %s87
      %p96 = scmp.eq.s32.totalorder %s34, 0
      %p97 = por %p95, %p96
      %p98 = scmp.ne.s32.totalorder %s86, %s87
      %p99 = scmp.eq.s32.totalorder %s35, 3
      %p100 = por %p98, %p99
      %p102 = scmp.ne.s32.totalorder %s87, %s101
      %p103 = scmp.eq.s32.totalorder %s35, 0
      %p104 = por %p102, %p103
      %s106 = sadd.s32 %s105, 1
      %p109 = scmp.eq.s32.totalorder %s29, 3
      %p110 = scmp.ne.s32.totalorder %s105, %s107
      %p111 = scmp.eq.s32.totalorder %s29, 0
      %p112 = por %p110, %p111
      %p113 = scmp.ne.s32.totalorder %s105, %s107
      %p114 = scmp.eq.s32.totalorder %s34, 3
      %p115 = por %p113, %p114
      %p116 = scmp.ne.s32.totalorder %s107, %s108
      %p117 = scmp.eq.s32.totalorder %s34, 0
      %p118 = por %p116, %p117
      %p119 = scmp.ne.s32.totalorder %s107, %s108
      %p120 = scmp.eq.s32.totalorder %s35, 3
      %p121 = por %p119, %p120
      %p123 = scmp.ne.s32.totalorder %s108, %s122
      %p124 = scmp.eq.s32.totalorder %s35, 0
      %p125 = por %p123, %p124
      %s127 = sadd.s32 %s126, 1
      %p130 = scmp.eq.s32.totalorder %s29, 3
      %p131 = scmp.ne.s32.totalorder %s126, %s128
      %p132 = scmp.eq.s32.totalorder %s29, 0
      %p133 = por %p131, %p132
      %p134 = scmp.ne.s32.totalorder %s126, %s128
      %p135 = scmp.eq.s32.totalorder %s34, 3
      %p136 = por %p134, %p135
      %p137 = scmp.ne.s32.totalorder %s128, %s129
      %p138 = scmp.eq.s32.totalorder %s34, 0
      %p139 = por %p137, %p138
      %p140 = scmp.ne.s32.totalorder %s128, %s129
      %p141 = scmp.eq.s32.totalorder %s35, 3
      %p142 = por %p140, %p141
      %p144 = scmp.ne.s32.totalorder %s129, %s143
      %p145 = scmp.eq.s32.totalorder %s35, 0
      %p146 = por %p144, %p145
      %s148 = sadd.s32 %s147, 1
      %p151 = scmp.eq.s32.totalorder %s29, 3
      %p152 = scmp.ne.s32.totalorder %s147, %s149
      %p153 = scmp.eq.s32.totalorder %s29, 0
      %p154 = por %p152, %p153
      %p155 = scmp.ne.s32.totalorder %s147, %s149
      %p156 = scmp.eq.s32.totalorder %s34, 3
      %p157 = por %p155, %p156
      %p158 = scmp.ne.s32.totalorder %s149, %s150
      %p159 = scmp.eq.s32.totalorder %s34, 0
      %p160 = por %p158, %p159
      %p161 = scmp.ne.s32.totalorder %s149, %s150
      %p162 = scmp.eq.s32.totalorder %s35, 3
      %p163 = por %p161, %p162
      %p165 = scmp.ne.s32.totalorder %s150, %s164
      %p166 = scmp.eq.s32.totalorder %s35, 0
      %p167 = por %p165, %p166
      %s169 = sadd.s32 %s168, 1
      %p172 = scmp.eq.s32.totalorder %s29, 3
      %p173 = scmp.ne.s32.totalorder %s168, %s170
      %p174 = scmp.eq.s32.totalorder %s29, 0
      %p175 = por %p173, %p174
      %p176 = scmp.ne.s32.totalorder %s168, %s170
      %p177 = scmp.eq.s32.totalorder %s34, 3
      %p178 = por %p176, %p177
      %p179 = scmp.ne.s32.totalorder %s170, %s171
      %p180 = scmp.eq.s32.totalorder %s34, 0
      %p181 = por %p179, %p180
      %p182 = scmp.ne.s32.totalorder %s170, %s171
      %p183 = scmp.eq.s32.totalorder %s35, 3
      %p184 = por %p182, %p183
      %p186 = scmp.ne.s32.totalorder %s171, %s185
      %p187 = scmp.eq.s32.totalorder %s35, 0
      %p188 = por %p186, %p187
      %s190 = sadd.s32 %s189, 1
      %p193 = scmp.eq.s32.totalorder %s29, 3
      %p194 = scmp.ne.s32.totalorder %s189, %s191
      %p195 = scmp.eq.s32.totalorder %s29, 0
      %p196 = por %p194, %p195
      %p197 = scmp.ne.s32.totalorder %s189, %s191
      %p198 = scmp.eq.s32.totalorder %s34, 3
      %p199 = por %p197, %p198
      %p200 = scmp.ne.s32.totalorder %s191, %s192
      %p201 = scmp.eq.s32.totalorder %s34, 0
      %p202 = por %p200, %p201
      %p203 = scmp.ne.s32.totalorder %s191, %s192
      %p204 = scmp.eq.s32.totalorder %s35, 3
      %p205 = por %p203, %p204
      %p207 = scmp.ne.s32.totalorder %s192, %s206
      %p208 = scmp.eq.s32.totalorder %s35, 0
      %p209 = por %p207, %p208
      %s211 = sadd.s32 %s210, 1
      %p214 = scmp.eq.s32.totalorder %s29, 3
      %p215 = scmp.ne.s32.totalorder %s210, %s212
      %p216 = scmp.eq.s32.totalorder %s29, 0
      %p217 = por %p215, %p216
      %p218 = scmp.ne.s32.totalorder %s210, %s212
      %p219 = scmp.eq.s32.totalorder %s34, 3
      %p220 = por %p218, %p219
      %p221 = scmp.ne.s32.totalorder %s212, %s213
      %p222 = scmp.eq.s32.totalorder %s34, 0
      %p223 = por %p221, %p222
      %p224 = scmp.ne.s32.totalorder %s212, %s213
      %p225 = scmp.eq.s32.totalorder %s35, 3
      %p226 = por %p224, %p225
      %p228 = scmp.ne.s32.totalorder %s213, %s227
      %p229 = scmp.eq.s32.totalorder %s35, 0
      %p230 = por %p228, %p229
      %s232 = sadd.s32 %s231, 1
      %p235 = scmp.eq.s32.totalorder %s29, 3
      %p236 = scmp.ne.s32.totalorder %s231, %s233
      %p237 = scmp.eq.s32.totalorder %s29, 0
      %p238 = por %p236, %p237
      %p239 = scmp.ne.s32.totalorder %s231, %s233
      %p240 = scmp.eq.s32.totalorder %s34, 3
      %p241 = por %p239, %p240
      %p242 = scmp.ne.s32.totalorder %s233, %s234
      %p243 = scmp.eq.s32.totalorder %s34, 0
      %p244 = por %p242, %p243
      %p245 = scmp.ne.s32.totalorder %s233, %s234
      %p246 = scmp.eq.s32.totalorder %s35, 3
      %p247 = por %p245, %p246
      %p249 = scmp.ne.s32.totalorder %s234, %s248
      %p250 = scmp.eq.s32.totalorder %s35, 0
      %p251 = por %p249, %p250
      %s253 = sadd.s32 %s252, 1
      %p256 = scmp.eq.s32.totalorder %s29, 3
      %p257 = scmp.ne.s32.totalorder %s252, %s254
      %p258 = scmp.eq.s32.totalorder %s29, 0
      %p259 = por %p257, %p258
      %p260 = scmp.ne.s32.totalorder %s252, %s254
      %p261 = scmp.eq.s32.totalorder %s34, 3
      %p262 = por %p260, %p261
      %p263 = scmp.ne.s32.totalorder %s254, %s255
      %p264 = scmp.eq.s32.totalorder %s34, 0
      %p265 = por %p263, %p264
      %p266 = scmp.ne.s32.totalorder %s254, %s255
      %p267 = scmp.eq.s32.totalorder %s35, 3
      %p268 = por %p266, %p267
      %p270 = scmp.ne.s32.totalorder %s255, %s269
      %p271 = scmp.eq.s32.totalorder %s35, 0
      %p272 = por %p270, %p271
      %s274 = sadd.s32 %s273, 1
      %p277 = scmp.eq.s32.totalorder %s29, 3
      %p278 = scmp.ne.s32.totalorder %s273, %s275
      %p279 = scmp.eq.s32.totalorder %s29, 0
      %p280 = por %p278, %p279
      %p281 = scmp.ne.s32.totalorder %s273, %s275
      %p282 = scmp.eq.s32.totalorder %s34, 3
      %p283 = por %p281, %p282
      %p284 = scmp.ne.s32.totalorder %s275, %s276
      %p285 = scmp.eq.s32.totalorder %s34, 0
      %p286 = por %p284, %p285
      %p287 = scmp.ne.s32.totalorder %s275, %s276
      %p288 = scmp.eq.s32.totalorder %s35, 3
      %p289 = por %p287, %p288
      %p291 = scmp.ne.s32.totalorder %s276, %s290
      %p292 = scmp.eq.s32.totalorder %s35, 0
      %p293 = por %p291, %p292
      %s295 = sadd.s32 %s294, 1
      %p298 = scmp.eq.s32.totalorder %s29, 3
      %p299 = scmp.ne.s32.totalorder %s294, %s296
      %p300 = scmp.eq.s32.totalorder %s29, 0
      %p301 = por %p299, %p300
      %p302 = scmp.ne.s32.totalorder %s294, %s296
      %p303 = scmp.eq.s32.totalorder %s34, 3
      %p304 = por %p302, %p303
      %p305 = scmp.ne.s32.totalorder %s296, %s297
      %p306 = scmp.eq.s32.totalorder %s34, 0
      %p307 = por %p305, %p306
      %p308 = scmp.ne.s32.totalorder %s296, %s297
      %p309 = scmp.eq.s32.totalorder %s35, 3
      %p310 = por %p308, %p309
      %p312 = scmp.ne.s32.totalorder %s297, %s311
      %p313 = scmp.eq.s32.totalorder %s35, 0
      %p314 = por %p312, %p313
      %s316 = sadd.s32 %s315, 1
      %p319 = scmp.eq.s32.totalorder %s29, 3
      %p320 = scmp.ne.s32.totalorder %s315, %s317
      %p321 = scmp.eq.s32.totalorder %s29, 0
      %p322 = por %p320, %p321
      %p323 = scmp.ne.s32.totalorder %s315, %s317
      %p324 = scmp.eq.s32.totalorder %s34, 3
      %p325 = por %p323, %p324
      %p326 = scmp.ne.s32.totalorder %s317, %s318
      %p327 = scmp.eq.s32.totalorder %s34, 0
      %p328 = por %p326, %p327
      %p329 = scmp.ne.s32.totalorder %s317, %s318
      %p330 = scmp.eq.s32.totalorder %s35, 3
      %p331 = por %p329, %p330
      %p333 = scmp.ne.s32.totalorder %s318, %s332
      %p334 = scmp.eq.s32.totalorder %s35, 0
      %p335 = por %p333, %p334
      %s337 = sadd.s32 %s336, 1
      %p340 = scmp.eq.s32.totalorder %s29, 3
      %p341 = scmp.ne.s32.totalorder %s336, %s338
      %p342 = scmp.eq.s32.totalorder %s29, 0
      %p343 = por %p341, %p342
      %p344 = scmp.ne.s32.totalorder %s336, %s338
      %p345 = scmp.eq.s32.totalorder %s34, 3
      %p346 = por %p344, %p345
      %p347 = scmp.ne.s32.totalorder %s338, %s339
      %p348 = scmp.eq.s32.totalorder %s34, 0
      %p349 = por %p347, %p348
      %p350 = scmp.ne.s32.totalorder %s338, %s339
      %p351 = scmp.eq.s32.totalorder %s35, 3
      %p352 = por %p350, %p351
      %p354 = scmp.ne.s32.totalorder %s339, %s353
      %p355 = scmp.eq.s32.totalorder %s35, 0
      %p356 = por %p354, %p355
      %s357 = ssub.s32 %s29, %s36
      %p358 = scmp.eq.s32.totalorder %s357, 0
      %s360 = sadd.s32 %s359, 1
      %s361 = scalar_select %p358, %s359, %s360
      %p364 = pneg %p358
      %p365 = scmp.eq.s32.totalorder %s29, 3
      %p366 = por %p364, %p365
      %p367 = scmp.ne.s32.totalorder %s359, %s362
      %p368 = scmp.eq.s32.totalorder %s29, 0
      %p369 = por %p367, %p368
      %p370 = scmp.ne.s32.totalorder %s359, %s362
      %p371 = scmp.eq.s32.totalorder %s34, 3
      %p372 = por %p370, %p371
      %p373 = scmp.ne.s32.totalorder %s362, %s363
      %p374 = scmp.eq.s32.totalorder %s34, 0
      %p375 = por %p373, %p374
      %p376 = scmp.ne.s32.totalorder %s362, %s363
      %p377 = scmp.eq.s32.totalorder %s35, 3
      %p378 = por %p376, %p377
      %p380 = scmp.ne.s32.totalorder %s363, %s379
      %p381 = scmp.eq.s32.totalorder %s35, 0
      %p382 = por %p380, %p381
      %p383 = scmp.le.s32.totalorder 1, %s29
      %p384 = scmp.lt.s32.totalorder %s29, 5
      %p385 = pnand %p383, %p384
      %p386 = pneg %p385
      // Predicated region
      $region9: #{tpu_custom_call.1} parent=5 // pred_check
        _
      $region10: #{tpu_custom_call.1} parent=5 // pred_check_branch
        %388 = sbr.rel (%p385) target = $region12
      $region11: #{tpu_custom_call.1} parent=5 // pred_region
        %s389 = ssub.s32 %s29, 1
        // Predicated region
        $region13: #{tpu_custom_call.1} parent=11 // pred_check
          %p390 = pneg %p76
        $region14: #{tpu_custom_call.1} parent=11 // pred_check_branch
          %392 = sbr.rel (%p390) target = $region16
        $region15: #{tpu_custom_call.1} parent=11 // pred_region
          _
        $region16: #{tpu_custom_call.1} parent=11 // pred_fallthru
          _
        // Predicated region
        $region17: #{tpu_custom_call.1} parent=11 // pred_check
          %p393 = pneg %p97
        $region18: #{tpu_custom_call.1} parent=11 // pred_check_branch
          %395 = sbr.rel (%p393) target = $region20
        $region19: #{tpu_custom_call.1} parent=11 // pred_region
          _
        $region20: #{tpu_custom_call.1} parent=11 // pred_fallthru
          _
        // Predicated region
        $region21: #{tpu_custom_call.1} parent=11 // pred_check
          %p396 = pneg %p118
        $region22: #{tpu_custom_call.1} parent=11 // pred_check_branch
          %398 = sbr.rel (%p396) target = $region24
        $region23: #{tpu_custom_call.1} parent=11 // pred_region
          _
        $region24: #{tpu_custom_call.1} parent=11 // pred_fallthru
          _
        // Predicated region
        $region25: #{tpu_custom_call.1} parent=11 // pred_check
          %p399 = pneg %p139
        $region26: #{tpu_custom_call.1} parent=11 // pred_check_branch
          %401 = sbr.rel (%p399) target = $region28
        $region27: #{tpu_custom_call.1} parent=11 // pred_region
          %403 = vsyncadd [#allocation6], 0
          %s405 = sshll.u32 %s4, 4
          %s406 = int_to_ptr.hbm [resolvable:$true] %s405
          %s407 = sshll.u32 [#allocation5], 4
          %s408 = int_to_ptr.vmem [resolvable:$true] %s407
          %410 = dma.hbm_to_vmem [thread:$0]  %s406, 16, %s408, [#allocation6]
        $region28: #{tpu_custom_call.1} parent=11 // pred_fallthru
          _
        // Predicated region
        $region29: #{tpu_custom_call.1} parent=11 // pred_check
          %p411 = pneg %p160
        $region30: #{tpu_custom_call.1} parent=11 // pred_check_branch
          %413 = sbr.rel (%p411) target = $region32
        $region31: #{tpu_custom_call.1} parent=11 // pred_region
          _
        $region32: #{tpu_custom_call.1} parent=11 // pred_fallthru
          _
        // Predicated region
        $region33: #{tpu_custom_call.1} parent=11 // pred_check
          %p414 = pneg %p181
        $region34: #{tpu_custom_call.1} parent=11 // pred_check_branch
          %416 = sbr.rel (%p414) target = $region36
        $region35: #{tpu_custom_call.1} parent=11 // pred_region
          _
        $region36: #{tpu_custom_call.1} parent=11 // pred_fallthru
          _
        // Predicated region
        $region37: #{tpu_custom_call.1} parent=11 // pred_check
          %p417 = pneg %p202
        $region38: #{tpu_custom_call.1} parent=11 // pred_check_branch
          %419 = sbr.rel (%p417) target = $region40
        $region39: #{tpu_custom_call.1} parent=11 // pred_region
          _
        $region40: #{tpu_custom_call.1} parent=11 // pred_fallthru
          _
        // Predicated region
        $region41: #{tpu_custom_call.1} parent=11 // pred_check
          %p420 = pneg %p223
        $region42: #{tpu_custom_call.1} parent=11 // pred_check_branch
          %422 = sbr.rel (%p420) target = $region44
        $region43: #{tpu_custom_call.1} parent=11 // pred_region
          _
        $region44: #{tpu_custom_call.1} parent=11 // pred_fallthru
          _
        // Predicated region
        $region45: #{tpu_custom_call.1} parent=11 // pred_check
          %p423 = pneg %p244
        $region46: #{tpu_custom_call.1} parent=11 // pred_check_branch
          %425 = sbr.rel (%p423) target = $region48
        $region47: #{tpu_custom_call.1} parent=11 // pred_region
          %427 = vsyncadd [#allocation6], 0
          %s428 = sshll.u32 %s9, 4
          %s429 = int_to_ptr.hbm [resolvable:$true] %s428
          %s430 = sshll.u32 [#allocation7], 4
          %s431 = int_to_ptr.vmem [resolvable:$true] %s430
          %436 = dma.hbm_to_vmem [thread:$0]  %s429, 128, %s431, [#allocation6], 64, 64, 4
        $region48: #{tpu_custom_call.1} parent=11 // pred_fallthru
          _
        // Predicated region
        $region49: #{tpu_custom_call.1} parent=11 // pred_check
          %p437 = pneg %p265
        $region50: #{tpu_custom_call.1} parent=11 // pred_check_branch
          %439 = sbr.rel (%p437) target = $region52
        $region51: #{tpu_custom_call.1} parent=11 // pred_region
          _
        $region52: #{tpu_custom_call.1} parent=11 // pred_fallthru
          _
        // Predicated region
        $region53: #{tpu_custom_call.1} parent=11 // pred_check
          %p440 = pneg %p286
        $region54: #{tpu_custom_call.1} parent=11 // pred_check_branch
          %442 = sbr.rel (%p440) target = $region56
        $region55: #{tpu_custom_call.1} parent=11 // pred_region
          %444 = vsyncadd [#allocation9], 0
          %s445 = sshll.u32 %s11, 4
          %s446 = int_to_ptr.hbm [resolvable:$true] %s445
          %s447 = sshll.u32 [#allocation8], 4
          %s448 = int_to_ptr.vmem [resolvable:$true] %s447
          %453 = dma.hbm_to_vmem [thread:$0]  %s446, 512, %s448, [#allocation9], 64, 64, 4
        $region56: #{tpu_custom_call.1} parent=11 // pred_fallthru
          _
        // Predicated region
        $region57: #{tpu_custom_call.1} parent=11 // pred_check
          %p454 = pneg %p307
        $region58: #{tpu_custom_call.1} parent=11 // pred_check_branch
          %456 = sbr.rel (%p454) target = $region60
        $region59: #{tpu_custom_call.1} parent=11 // pred_region
          _
        $region60: #{tpu_custom_call.1} parent=11 // pred_fallthru
          _
        // Predicated region
        $region61: #{tpu_custom_call.1} parent=11 // pred_check
          %p457 = pneg %p328
        $region62: #{tpu_custom_call.1} parent=11 // pred_check_branch
          %459 = sbr.rel (%p457) target = $region64
        $region63: #{tpu_custom_call.1} parent=11 // pred_region
          %461 = vsyncadd [#allocation9], 0
          %s462 = sshll.u32 %s13, 4
          %s463 = int_to_ptr.hbm [resolvable:$true] %s462
          %s464 = sshll.u32 [#allocation10], 4
          %s465 = int_to_ptr.vmem [resolvable:$true] %s464
          %470 = dma.hbm_to_vmem [thread:$0]  %s463, 2048, %s465, [#allocation9], 128, 128, 8
        $region64: #{tpu_custom_call.1} parent=11 // pred_fallthru
          _
        // Predicated region
        $region65: #{tpu_custom_call.1} parent=11 // pred_check
          %p471 = pneg %p349
        $region66: #{tpu_custom_call.1} parent=11 // pred_check_branch
          %473 = sbr.rel (%p471) target = $region68
        $region67: #{tpu_custom_call.1} parent=11 // pred_region
          _
        $region68: #{tpu_custom_call.1} parent=11 // pred_fallthru
          _
      $region12: #{tpu_custom_call.1} parent=5 // pred_fallthru
        _
      %p474 = scmp.lt.s32.totalorder %s29, 4
      // Predicated region
      $region69: #{tpu_custom_call.1} parent=5 // pred_check
        %p475 = pneg %p474
      $region70: #{tpu_custom_call.1} parent=5 // pred_check_branch
        %477 = sbr.rel (%p475) target = $region72
      $region71: #{tpu_custom_call.1} parent=5 // pred_region
        // Predicated region
        $region73: #{tpu_custom_call.1} parent=71 // pred_check
          %p478 = pneg %p49
        $region74: #{tpu_custom_call.1} parent=71 // pred_check_branch
          %480 = sbr.rel (%p478) target = $region76
        $region75: #{tpu_custom_call.1} parent=71 // pred_region
          %s481 = sand.u32 %s39, 1
          %s482 = scalar_lea.sflag [#allocation3], %s481
          %s483 = sand.u32 %s39, 1
          %s484 = smul.addr %s483, 16
          %s485 = scalar_lea.vmem [#allocation2], %s484
          %s486 = smul.u32 2, %s29
          %488 = vsyncadd %s482, 0
          %s489 = smul.addr %s486, 2
          %s490 = smul.addr %s489, 4
          %s491 = scalar_lea.hbm %s0, %s490
          %s492 = sshll.u32 %s491, 4
          %s493 = int_to_ptr.hbm [resolvable:$true] %s492
          %s494 = sshll.u32 %s485, 4
          %s495 = int_to_ptr.vmem [resolvable:$true] %s494
          %500 = dma.hbm_to_vmem [thread:$0]  %s493, 256, %s495, %s482, 128, 128, 8
        $region76: #{tpu_custom_call.1} parent=71 // pred_fallthru
          _
      $region72: #{tpu_custom_call.1} parent=5 // pred_fallthru
        _
      %p501 = scmp.le.s32.totalorder 1, %s29
      %p502 = scmp.lt.s32.totalorder %s29, 5
      %p503 = pnand %p501, %p502
      %p504 = pneg %p503
      // Predicated region
      $region77: #{tpu_custom_call.1} parent=5 // pred_check
        _
      $region78: #{tpu_custom_call.1} parent=5 // pred_check_branch
        %506 = sbr.rel (%p503) target = $region80
      $region79: #{tpu_custom_call.1} parent=5 // pred_region
        %s507 = ssub.s32 %s29, 1
        %s508 = sand.u32 %s42, 1
        %s509 = scalar_lea.sflag [#allocation3], %s508
        %s510 = sand.u32 %s42, 1
        %s511 = smul.addr %s510, 16
        %s512 = scalar_lea.vmem [#allocation2], %s511
        // Predicated region
        $region81: #{tpu_custom_call.1} parent=79 // pred_check
          %p513 = pneg %p55
        $region82: #{tpu_custom_call.1} parent=79 // pred_check_branch
          %515 = sbr.rel (%p513) target = $region84
        $region83: #{tpu_custom_call.1} parent=79 // pred_region
          %517 = dma.done %s509, 256
        $region84: #{tpu_custom_call.1} parent=79 // pred_fallthru
          _
        // Predicated region
        $region85: #{tpu_custom_call.1} parent=79 // pred_check
          %p518 = pneg %p139
        $region86: #{tpu_custom_call.1} parent=79 // pred_check_branch
          %520 = sbr.rel (%p518) target = $region88
        $region87: #{tpu_custom_call.1} parent=79 // pred_region
          %522 = dma.done [#allocation6], 16
        $region88: #{tpu_custom_call.1} parent=79 // pred_fallthru
          _
        // Predicated region
        $region89: #{tpu_custom_call.1} parent=79 // pred_check
          %p523 = pneg %p244
        $region90: #{tpu_custom_call.1} parent=79 // pred_check_branch
          %525 = sbr.rel (%p523) target = $region92
        $region91: #{tpu_custom_call.1} parent=79 // pred_region
          %527 = dma.done [#allocation6], 128
        $region92: #{tpu_custom_call.1} parent=79 // pred_fallthru
          _
        // Predicated region
        $region93: #{tpu_custom_call.1} parent=79 // pred_check
          %p528 = pneg %p286
        $region94: #{tpu_custom_call.1} parent=79 // pred_check_branch
          %530 = sbr.rel (%p528) target = $region96
        $region95: #{tpu_custom_call.1} parent=79 // pred_region
          %532 = dma.done [#allocation9], 512
        $region96: #{tpu_custom_call.1} parent=79 // pred_fallthru
          _
        // Predicated region
        $region97: #{tpu_custom_call.1} parent=79 // pred_check
          %p533 = pneg %p328
        $region98: #{tpu_custom_call.1} parent=79 // pred_check_branch
          %535 = sbr.rel (%p533) target = $region100
        $region99: #{tpu_custom_call.1} parent=79 // pred_region
          %537 = dma.done [#allocation9], 2048
        $region100: #{tpu_custom_call.1} parent=79 // pred_fallthru
          _
        %s538 = sand.u32 %s42, 1
        %s539 = scalar_lea.sflag [#allocation3], %s538
        %s540 = sand.u32 %s42, 1
        %s541 = smul.addr %s540, 16
        %s542 = scalar_lea.vmem [#allocation2], %s541
        %p543 = pneg %p55
        %p544 = pneg %p52
        %p545 = pneg %p76
        %p546 = pneg %p73
        %p547 = pneg %p97
        %p548 = pneg %p94
        %p549 = pneg %p118
        %p550 = pneg %p115
        %p551 = pneg %p139
        %p552 = pneg %p136
        %p553 = pneg %p160
        %p554 = pneg %p157
        %p555 = pneg %p181
        %p556 = pneg %p178
        %p557 = pneg %p202
        %p558 = pneg %p199
        %p559 = pneg %p223
        %p560 = pneg %p220
        %p561 = pneg %p244
        %p562 = pneg %p241
        %p563 = pneg %p265
        %p564 = pneg %p262
        %p565 = pneg %p286
        %p566 = pneg %p283
        %p567 = pneg %p307
        %p568 = pneg %p304
        %p569 = pneg %p328
        %p570 = pneg %p325
        %p571 = pneg %p349
        %p572 = pneg %p346
        %p573 = pneg %p375
        %p574 = pneg %p372
        %s575 = sand.u32 %s362, 1
        %s576 = scalar_lea.sflag [#allocation4], %s575
        %s577 = sand.u32 %s362, 1
        %s578 = smul.addr %s577, 32
        %s579 = scalar_lea.vmem [#allocation11], %s578
        %s580 = smul.u32 2, %s34
        %s581 = smul.u32 2, %s34
        %v583 = vld [vmem:[%s512] sm:$0xff]
        %v584 = vld [vmem:[%s512 + $0x8] sm:$0xff]
        %v585 = vld [vmem:[%s1] sm:$0xf]
        %v586 = vld [vmem:[%s1 + $0x4] sm:$0xf]
        %v587 = vld [vmem:[%s1 + $0x8] sm:$0xf]
        %v588 = vld [vmem:[%s1 + $0xc] sm:$0xf]
        %v589 = vld [vmem:[%s1 + $0x10] sm:$0xf]
        %v590 = vld [vmem:[%s1 + $0x14] sm:$0xf]
        %v591 = vld [vmem:[%s1 + $0x18] sm:$0xf]
        %v592 = vld [vmem:[%s1 + $0x1c] sm:$0xf]
        %v593 = vld [vmem:[%s1 + $0x20] sm:$0xf]
        %v594 = vld [vmem:[%s1 + $0x24] sm:$0xf]
        %v595 = vld [vmem:[%s1 + $0x28] sm:$0xf]
        %v596 = vld [vmem:[%s1 + $0x2c] sm:$0xf]
        %v597 = vld [vmem:[%s1 + $0x30] sm:$0xf]
        %v598 = vld [vmem:[%s1 + $0x34] sm:$0xf]
        %v599 = vld [vmem:[%s1 + $0x38] sm:$0xf]
        %v600 = vld [vmem:[%s1 + $0x3c] sm:$0xf]
        %v601 = vld [vmem:[%s1 + $0x40] sm:$0xf]
        %v602 = vld [vmem:[%s1 + $0x44] sm:$0xf]
        %v603 = vld [vmem:[%s1 + $0x48] sm:$0xf]
        %v604 = vld [vmem:[%s1 + $0x4c] sm:$0xf]
        %v605 = vld [vmem:[%s1 + $0x50] sm:$0xf]
        %v606 = vld [vmem:[%s1 + $0x54] sm:$0xf]
        %v607 = vld [vmem:[%s1 + $0x58] sm:$0xf]
        %v608 = vld [vmem:[%s1 + $0x5c] sm:$0xf]
        %v609 = vld [vmem:[%s1 + $0x60] sm:$0xf]
        %v610 = vld [vmem:[%s1 + $0x64] sm:$0xf]
        %v611 = vld [vmem:[%s1 + $0x68] sm:$0xf]
        %v612 = vld [vmem:[%s1 + $0x6c] sm:$0xf]
        %v613 = vld [vmem:[%s1 + $0x70] sm:$0xf]
        %v614 = vld [vmem:[%s1 + $0x74] sm:$0xf]
        %v615 = vld [vmem:[%s1 + $0x78] sm:$0xf]
        %v616 = vld [vmem:[%s1 + $0x7c] sm:$0xf]
        %v617 = vld [vmem:[%s2] sm:$0x1]
        %v619 = vperm.slane %v617, 0
        %v623 = vunpack.c.l.b16 %v583
        %v624 = vunpack.c.h.b16 %v583
        %v625 = vunpack.c.l.b16 %v584
        %v626 = vunpack.c.h.b16 %v584
        %v627 = vpack.c.b16 %v625, %v623
        %v628 = vpack.c.b16 %v626, %v624
        %v663 = vunpack.c.l.b16 %v585
        %v664 = vunpack.c.l.b16 %v586
        %v665 = vunpack.c.l.b16 %v587
        %v666 = vunpack.c.l.b16 %v588
        %v667 = vunpack.c.l.b16 %v589
        %v668 = vunpack.c.l.b16 %v590
        %v669 = vunpack.c.l.b16 %v591
        %v670 = vunpack.c.l.b16 %v592
        %v671 = vunpack.c.l.b16 %v593
        %v672 = vunpack.c.l.b16 %v594
        %v673 = vunpack.c.l.b16 %v595
        %v674 = vunpack.c.l.b16 %v596
        %v675 = vunpack.c.l.b16 %v597
        %v676 = vunpack.c.l.b16 %v598
        %v677 = vunpack.c.l.b16 %v599
        %v678 = vunpack.c.l.b16 %v600
        %v679 = vunpack.c.l.b16 %v601
        %v680 = vunpack.c.l.b16 %v602
        %v681 = vunpack.c.l.b16 %v603
        %v682 = vunpack.c.l.b16 %v604
        %v683 = vunpack.c.l.b16 %v605
        %v684 = vunpack.c.l.b16 %v606
        %v685 = vunpack.c.l.b16 %v607
        %v686 = vunpack.c.l.b16 %v608
        %v687 = vunpack.c.l.b16 %v609
        %v688 = vunpack.c.l.b16 %v610
        %v689 = vunpack.c.l.b16 %v611
        %v690 = vunpack.c.l.b16 %v612
        %v691 = vunpack.c.l.b16 %v613
        %v692 = vunpack.c.l.b16 %v614
        %v693 = vunpack.c.l.b16 %v615
        %v694 = vunpack.c.l.b16 %v616
        %v695 = vpack.c.b16 %v664, %v663
        %v696 = vpack.c.b16 %v666, %v665
        %v697 = vpack.c.b16 %v668, %v667
        %v698 = vpack.c.b16 %v670, %v669
        %v699 = vpack.c.b16 %v672, %v671
        %v700 = vpack.c.b16 %v674, %v673
        %v701 = vpack.c.b16 %v676, %v675
        %v702 = vpack.c.b16 %v678, %v677
        %v703 = vpack.c.b16 %v680, %v679
        %v704 = vpack.c.b16 %v682, %v681
        %v705 = vpack.c.b16 %v684, %v683
        %v706 = vpack.c.b16 %v686, %v685
        %v707 = vpack.c.b16 %v688, %v687
        %v708 = vpack.c.b16 %v690, %v689
        %v709 = vpack.c.b16 %v692, %v691
        %v710 = vpack.c.b16 %v694, %v693
        %727 = vmatpush.bf16.msra.mxu0 %v702
        %728 = vmatpush.bf16.msra.mxu0 %v701
        %729 = vmatpush.bf16.msra.mxu0 %v700
        %730 = vmatpush.bf16.msra.mxu0 %v699
        %731 = vmatpush.bf16.msra.mxu0 %v698
        %732 = vmatpush.bf16.msra.mxu0 %v697
        %733 = vmatpush.bf16.msra.mxu0 %v696
        %734 = vmatpush.bf16.msra.mxu0 %v695
        %735 = vmatmul.bf16.gmra.mxu0 %v627
        %v736 = vpop.f32.mrf.mxu0
        %v737 = vadd.f32 %v619, %v736
        %v738 = vpop.f32.mrf.mxu0
        %v739 = vadd.f32 %v619, %v738
        %740 = vdwg.mxu0
        %741 = vmatpush.bf16.msra.mxu0 %v710
        %742 = vmatpush.bf16.msra.mxu0 %v709
        %743 = vmatpush.bf16.msra.mxu0 %v708
        %744 = vmatpush.bf16.msra.mxu0 %v707
        %745 = vmatpush.bf16.msra.mxu0 %v706
        %746 = vmatpush.bf16.msra.mxu0 %v705
        %747 = vmatpush.bf16.msra.mxu0 %v704
        %748 = vmatpush.bf16.msra.mxu0 %v703
        %749 = vmatmul.bf16.gmra.mxu0 %v628
        %v750 = vpop.f32.mrf.mxu0
        %v751 = vadd.f32 %v737, %v750
        %v752 = vpop.f32.mrf.mxu0
        %v753 = vadd.f32 %v739, %v752
        %754 = vdwg.mxu0
        %v755 = vmax.f32 %v751, 0.0
        %v756 = vmax.f32 %v753, 0.0
        %v757 = vpack.c.bf16 %v756, %v755
        %v758 = vld [vmem:[%s3] sm:$0xf]
        %v759 = vld [vmem:[%s3 + $0x4] sm:$0xf]
        %v760 = vld [vmem:[%s3 + $0x8] sm:$0xf]
        %v761 = vld [vmem:[%s3 + $0xc] sm:$0xf]
        %v762 = vld [vmem:[%s3 + $0x10] sm:$0xf]
        %v763 = vld [vmem:[%s3 + $0x14] sm:$0xf]
        %v764 = vld [vmem:[%s3 + $0x18] sm:$0xf]
        %v765 = vld [vmem:[%s3 + $0x1c] sm:$0xf]
        %v766 = vld [vmem:[%s3 + $0x20] sm:$0xf]
        %v767 = vld [vmem:[%s3 + $0x24] sm:$0xf]
        %v768 = vld [vmem:[%s3 + $0x28] sm:$0xf]
        %v769 = vld [vmem:[%s3 + $0x2c] sm:$0xf]
        %v770 = vld [vmem:[%s3 + $0x30] sm:$0xf]
        %v771 = vld [vmem:[%s3 + $0x34] sm:$0xf]
        %v772 = vld [vmem:[%s3 + $0x38] sm:$0xf]
        %v773 = vld [vmem:[%s3 + $0x3c] sm:$0xf]
        %v774 = vld [vmem:[#allocation5] sm:$0x1]
        %v776 = vperm.slane %v774, 0
        %v794 = vunpack.c.l.b16 %v758
        %v795 = vunpack.c.l.b16 %v759
        %v796 = vunpack.c.l.b16 %v760
        %v797 = vunpack.c.l.b16 %v761
        %v798 = vunpack.c.l.b16 %v762
        %v799 = vunpack.c.l.b16 %v763
        %v800 = vunpack.c.l.b16 %v764
        %v801 = vunpack.c.l.b16 %v765
        %v802 = vunpack.c.l.b16 %v766
        %v803 = vunpack.c.l.b16 %v767
        %v804 = vunpack.c.l.b16 %v768
        %v805 = vunpack.c.l.b16 %v769
        %v806 = vunpack.c.l.b16 %v770
        %v807 = vunpack.c.l.b16 %v771
        %v808 = vunpack.c.l.b16 %v772
        %v809 = vunpack.c.l.b16 %v773
        %v810 = vpack.c.b16 %v795, %v794
        %v811 = vpack.c.b16 %v797, %v796
        %v812 = vpack.c.b16 %v799, %v798
        %v813 = vpack.c.b16 %v801, %v800
        %v814 = vpack.c.b16 %v803, %v802
        %v815 = vpack.c.b16 %v805, %v804
        %v816 = vpack.c.b16 %v807, %v806
        %v817 = vpack.c.b16 %v809, %v808
        %826 = vmatpush.bf16.msra.mxu0 %v817
        %827 = vmatpush.bf16.msra.mxu0 %v816
        %828 = vmatpush.bf16.msra.mxu0 %v815
        %829 = vmatpush.bf16.msra.mxu0 %v814
        %830 = vmatpush.bf16.msra.mxu0 %v813
        %831 = vmatpush.bf16.msra.mxu0 %v812
        %832 = vmatpush.bf16.msra.mxu0 %v811
        %833 = vmatpush.bf16.msra.mxu0 %v810
        %834 = vmatmul.bf16.gmra.mxu0 %v757
        %v835 = vpop.f32.mrf.mxu0
        %v836 = vadd.f32 %v776, %v835
        %v837 = vpop.f32.mrf.mxu0
        %v838 = vadd.f32 %v776, %v837
        %839 = vdwg.mxu0
        %v840 = vmax.f32 %v836, 0.0
        %v841 = vmax.f32 %v838, 0.0
        %v842 = vpack.c.bf16 %v841, %v840
        %v843 = vld [vmem:[%s5] sm:$0xf]
        %v844 = vld [vmem:[%s5 + $0x4] sm:$0xf]
        %v845 = vld [vmem:[%s5 + $0x8] sm:$0xf]
        %v846 = vld [vmem:[%s5 + $0xc] sm:$0xf]
        %v847 = vld [vmem:[%s5 + $0x10] sm:$0xf]
        %v848 = vld [vmem:[%s5 + $0x14] sm:$0xf]
        %v849 = vld [vmem:[%s5 + $0x18] sm:$0xf]
        %v850 = vld [vmem:[%s5 + $0x1c] sm:$0xf]
        %v851 = vld [vmem:[%s6] sm:$0x1]
        %v853 = vperm.slane %v851, 0
        %v863 = vunpack.c.l.b16 %v843
        %v864 = vunpack.c.l.b16 %v844
        %v865 = vunpack.c.l.b16 %v845
        %v866 = vunpack.c.l.b16 %v846
        %v867 = vunpack.c.l.b16 %v847
        %v868 = vunpack.c.l.b16 %v848
        %v869 = vunpack.c.l.b16 %v849
        %v870 = vunpack.c.l.b16 %v850
        %v871 = vpack.c.b16 %v864, %v863
        %v872 = vpack.c.b16 %v866, %v865
        %v873 = vpack.c.b16 %v868, %v867
        %v874 = vpack.c.b16 %v870, %v869
        %vm879 = vcmask 523264
        %v881 = vsel %vm879, %v842, 0
        %883 = vmatpush.bf16.msra.mxu0 0
        %884 = vmatpush.bf16.msra.mxu0 0
        %885 = vmatpush.bf16.msra.mxu0 0
        %886 = vmatpush.bf16.msra.mxu0 0
        %887 = vmatpush.bf16.msra.mxu0 %v874
        %888 = vmatpush.bf16.msra.mxu0 %v873
        %889 = vmatpush.bf16.msra.mxu0 %v872
        %890 = vmatpush.bf16.msra.mxu0 %v871
        %891 = vmatmul.bf16.gmra.mxu0 %v881
        %v892 = vpop.f32.mrf.mxu0
        %v893 = vadd.f32 %v853, %v892
        %v894 = vpop.f32.mrf.mxu0
        %v895 = vadd.f32 %v853, %v894
        %896 = vdwg.mxu0
        %v897 = vmax.f32 %v893, 0.0
        %v898 = vmax.f32 %v895, 0.0
        %v899 = vpack.c.bf16 %v898, %v897
        %v900 = vld [vmem:[%s7] sm:$0xf]
        %v901 = vld [vmem:[%s7 + $0x4] sm:$0x3]
        %v902 = vld [vmem:[%s8] sm:$0x1]
        %v904 = vperm.slane %v902, 0
        %v908 = vunpack.c.l.b16 %v900
        %v909 = vunpack.c.l.b16 %v901
        %v910 = vpack.c.b16 %v909, %v908
        %vm911 = vcmask 97280
        %v913 = vsel %vm911, %v899, 0
        %vm915 = vcmask 1045504
        %v917 = vsel %vm915, %v910, 0
        %919 = vmatpush.bf16.msra.mxu0 0
        %920 = vmatpush.bf16.msra.mxu0 0
        %921 = vmatpush.bf16.msra.mxu0 0
        %922 = vmatpush.bf16.msra.mxu0 0
        %923 = vmatpush.bf16.msra.mxu0 0
        %924 = vmatpush.bf16.msra.mxu0 0
        %925 = vmatpush.bf16.msra.mxu0 0
        %926 = vmatpush.bf16.msra.mxu0 %v917
        %927 = vmatmul.bf16.gmra.mxu0 %v913
        %v928 = vpop.f32.mrf.mxu0
        %v929 = vadd.f32 %v904, %v928
        %v930 = vpop.f32.mrf.mxu0
        %v931 = vadd.f32 %v904, %v930
        %932 = vdwg.mxu0
        %v933 = vmax.f32 %v929, 0.0
        %v934 = vmax.f32 %v931, 0.0
        %v935 = vpack.c.bf16 %v934, %v933
        %v936 = vld [vmem:[#allocation7] sm:$0xf]
        %v937 = vld [vmem:[#allocation7 + $0x4] sm:$0x3]
        %v938 = vld [vmem:[%s10] sm:$0x1]
        %v940 = vperm.slane %v938, 0
        %v944 = vunpack.c.l.b16 %v936
        %v945 = vunpack.c.l.b16 %v937
        %v946 = vpack.c.b16 %v945, %v944
        %v948 = vsel %vm911, %v935, 0
        %v951 = vsel %vm915, %v946, 0
        %953 = vmatpush.bf16.msra.mxu0 0
        %954 = vmatpush.bf16.msra.mxu0 0
        %955 = vmatpush.bf16.msra.mxu0 0
        %956 = vmatpush.bf16.msra.mxu0 0
        %957 = vmatpush.bf16.msra.mxu0 0
        %958 = vmatpush.bf16.msra.mxu0 0
        %959 = vmatpush.bf16.msra.mxu0 0
        %960 = vmatpush.bf16.msra.mxu0 %v951
        %961 = vmatmul.bf16.gmra.mxu0 %v948
        %v962 = vpop.f32.mrf.mxu0
        %v963 = vadd.f32 %v940, %v962
        %v964 = vpop.f32.mrf.mxu0
        %v965 = vadd.f32 %v940, %v964
        %966 = vdwg.mxu0
        %v967 = vmax.f32 %v963, 0.0
        %v968 = vmax.f32 %v965, 0.0
        %v969 = vpack.c.bf16 %v968, %v967
        %v970 = vld [vmem:[#allocation8] sm:$0xf]
        %v971 = vld [vmem:[#allocation8 + $0x4] sm:$0xf]
        %v972 = vld [vmem:[#allocation8 + $0x8] sm:$0xf]
        %v973 = vld [vmem:[#allocation8 + $0xc] sm:$0xf]
        %v974 = vld [vmem:[#allocation8 + $0x10] sm:$0xf]
        %v975 = vld [vmem:[#allocation8 + $0x14] sm:$0xf]
        %v976 = vld [vmem:[#allocation8 + $0x18] sm:$0xf]
        %v977 = vld [vmem:[#allocation8 + $0x1c] sm:$0xf]
        %v978 = vld [vmem:[%s12] sm:$0x1]
        %v980 = vperm.slane %v978, 0
        %v990 = vunpack.c.l.b16 %v970
        %v991 = vunpack.c.l.b16 %v971
        %v992 = vunpack.c.l.b16 %v972
        %v993 = vunpack.c.l.b16 %v973
        %v994 = vunpack.c.l.b16 %v974
        %v995 = vunpack.c.l.b16 %v975
        %v996 = vunpack.c.l.b16 %v976
        %v997 = vunpack.c.l.b16 %v977
        %v998 = vpack.c.b16 %v991, %v990
        %v999 = vpack.c.b16 %v993, %v992
        %v1000 = vpack.c.b16 %v995, %v994
        %v1001 = vpack.c.b16 %v997, %v996
        %v1007 = vsel %vm879, %v969, 0
        %1009 = vmatpush.bf16.msra.mxu0 0
        %1010 = vmatpush.bf16.msra.mxu0 0
        %1011 = vmatpush.bf16.msra.mxu0 0
        %1012 = vmatpush.bf16.msra.mxu0 0
        %1013 = vmatpush.bf16.msra.mxu0 %v1001
        %1014 = vmatpush.bf16.msra.mxu0 %v1000
        %1015 = vmatpush.bf16.msra.mxu0 %v999
        %1016 = vmatpush.bf16.msra.mxu0 %v998
        %1017 = vmatmul.bf16.gmra.mxu0 %v1007
        %v1018 = vpop.f32.mrf.mxu0
        %v1019 = vadd.f32 %v980, %v1018
        %v1020 = vpop.f32.mrf.mxu0
        %v1021 = vadd.f32 %v980, %v1020
        %1022 = vdwg.mxu0
        %v1023 = vmax.f32 %v1019, 0.0
        %v1024 = vmax.f32 %v1021, 0.0
        %v1025 = vpack.c.bf16 %v1024, %v1023
        %v1026 = vld [vmem:[#allocation10] sm:$0xff]
        %v1027 = vld [vmem:[#allocation10 + $0x8] sm:$0xff]
        %v1028 = vld [vmem:[#allocation10 + $0x10] sm:$0xff]
        %v1029 = vld [vmem:[#allocation10 + $0x18] sm:$0xff]
        %v1030 = vld [vmem:[#allocation10 + $0x20] sm:$0xff]
        %v1031 = vld [vmem:[#allocation10 + $0x28] sm:$0xff]
        %v1032 = vld [vmem:[#allocation10 + $0x30] sm:$0xff]
        %v1033 = vld [vmem:[#allocation10 + $0x38] sm:$0xff]
        %v1034 = vld [vmem:[#allocation10 + $0x40] sm:$0xff]
        %v1035 = vld [vmem:[#allocation10 + $0x48] sm:$0xff]
        %v1036 = vld [vmem:[#allocation10 + $0x50] sm:$0xff]
        %v1037 = vld [vmem:[#allocation10 + $0x58] sm:$0xff]
        %v1038 = vld [vmem:[#allocation10 + $0x60] sm:$0xff]
        %v1039 = vld [vmem:[#allocation10 + $0x68] sm:$0xff]
        %v1040 = vld [vmem:[#allocation10 + $0x70] sm:$0xff]
        %v1041 = vld [vmem:[#allocation10 + $0x78] sm:$0xff]
        %v1042 = vld [vmem:[%s14] sm:$0x3]
        %v1044 = vperm.slane %v1042, 0
        %v1045 = vperm.slane %v1042, 1
        %v1064 = vunpack.c.l.b16 %v1026
        %v1065 = vunpack.c.h.b16 %v1026
        %v1066 = vunpack.c.l.b16 %v1027
        %v1067 = vunpack.c.h.b16 %v1027
        %v1068 = vunpack.c.l.b16 %v1028
        %v1069 = vunpack.c.h.b16 %v1028
        %v1070 = vunpack.c.l.b16 %v1029
        %v1071 = vunpack.c.h.b16 %v1029
        %v1072 = vunpack.c.l.b16 %v1030
        %v1073 = vunpack.c.h.b16 %v1030
        %v1074 = vunpack.c.l.b16 %v1031
        %v1075 = vunpack.c.h.b16 %v1031
        %v1076 = vunpack.c.l.b16 %v1032
        %v1077 = vunpack.c.h.b16 %v1032
        %v1078 = vunpack.c.l.b16 %v1033
        %v1079 = vunpack.c.h.b16 %v1033
        %v1080 = vunpack.c.l.b16 %v1034
        %v1081 = vunpack.c.h.b16 %v1034
        %v1082 = vunpack.c.l.b16 %v1035
        %v1083 = vunpack.c.h.b16 %v1035
        %v1084 = vunpack.c.l.b16 %v1036
        %v1085 = vunpack.c.h.b16 %v1036
        %v1086 = vunpack.c.l.b16 %v1037
        %v1087 = vunpack.c.h.b16 %v1037
        %v1088 = vunpack.c.l.b16 %v1038
        %v1089 = vunpack.c.h.b16 %v1038
        %v1090 = vunpack.c.l.b16 %v1039
        %v1091 = vunpack.c.h.b16 %v1039
        %v1092 = vunpack.c.l.b16 %v1040
        %v1093 = vunpack.c.h.b16 %v1040
        %v1094 = vunpack.c.l.b16 %v1041
        %v1095 = vunpack.c.h.b16 %v1041
        %v1096 = vpack.c.b16 %v1066, %v1064
        %v1097 = vpack.c.b16 %v1067, %v1065
        %v1098 = vpack.c.b16 %v1070, %v1068
        %v1099 = vpack.c.b16 %v1071, %v1069
        %v1100 = vpack.c.b16 %v1074, %v1072
        %v1101 = vpack.c.b16 %v1075, %v1073
        %v1102 = vpack.c.b16 %v1078, %v1076
        %v1103 = vpack.c.b16 %v1079, %v1077
        %v1104 = vpack.c.b16 %v1082, %v1080
        %v1105 = vpack.c.b16 %v1083, %v1081
        %v1106 = vpack.c.b16 %v1086, %v1084
        %v1107 = vpack.c.b16 %v1087, %v1085
        %v1108 = vpack.c.b16 %v1090, %v1088
        %v1109 = vpack.c.b16 %v1091, %v1089
        %v1110 = vpack.c.b16 %v1094, %v1092
        %v1111 = vpack.c.b16 %v1095, %v1093
        %1128 = vmatpush.bf16.msra.mxu0 %v1110
        %1129 = vmatpush.bf16.msra.mxu0 %v1108
        %1130 = vmatpush.bf16.msra.mxu0 %v1106
        %1131 = vmatpush.bf16.msra.mxu0 %v1104
        %1132 = vmatpush.bf16.msra.mxu0 %v1102
        %1133 = vmatpush.bf16.msra.mxu0 %v1100
        %1134 = vmatpush.bf16.msra.mxu0 %v1098
        %1135 = vmatpush.bf16.msra.mxu0 %v1096
        %1136 = vmatmul.bf16.gmra.mxu0 %v1025
        %v1137 = vpop.f32.mrf.mxu0
        %v1138 = vadd.f32 %v1044, %v1137
        %v1139 = vpop.f32.mrf.mxu0
        %v1140 = vadd.f32 %v1044, %v1139
        %1141 = vdwg.mxu0
        %1142 = vmatpush.bf16.msra.mxu0 %v1111
        %1143 = vmatpush.bf16.msra.mxu0 %v1109
        %1144 = vmatpush.bf16.msra.mxu0 %v1107
        %1145 = vmatpush.bf16.msra.mxu0 %v1105
        %1146 = vmatpush.bf16.msra.mxu0 %v1103
        %1147 = vmatpush.bf16.msra.mxu0 %v1101
        %1148 = vmatpush.bf16.msra.mxu0 %v1099
        %1149 = vmatpush.bf16.msra.mxu0 %v1097
        %1150 = vmatmul.bf16.gmra.mxu0 %v1025
        %v1151 = vpop.f32.mrf.mxu0
        %v1152 = vadd.f32 %v1045, %v1151
        %v1153 = vpop.f32.mrf.mxu0
        %v1154 = vadd.f32 %v1045, %v1153
        %1155 = vdwg.mxu0
        %v1156 = vsub.f32 0.0, %v1138
        %v1157 = vsub.f32 0.0, %v1152
        %v1158 = vsub.f32 0.0, %v1140
        %v1159 = vsub.f32 0.0, %v1154
        %v1160 = vmul.f32 %v1156, 1.442695
        %v1161 = vpow.pop %v1160
        %v1162 = vmul.f32 %v1157, 1.442695
        %v1163 = vpow.pop %v1162
        %v1164 = vmul.f32 %v1158, 1.442695
        %v1165 = vpow.pop %v1164
        %v1166 = vmul.f32 %v1159, 1.442695
        %v1167 = vpow.pop %v1166
        %v1168 = vadd.f32 %v1161, 1.0
        %v1169 = vadd.f32 %v1163, 1.0
        %v1170 = vadd.f32 %v1165, 1.0
        %v1171 = vadd.f32 %v1167, 1.0
        %v1172 = vrcp.pop %v1168
        %v1173 = vrcp.pop %v1169
        %v1174 = vrcp.pop %v1170
        %v1175 = vrcp.pop %v1171
        %1176 = vst [vmem:[%s579] sm:$0xff] %v1172
        %1177 = vst [vmem:[%s579 + $0x8] sm:$0xff] %v1173
        %1178 = vst [vmem:[%s579 + $0x10] sm:$0xff] %v1174
        %1179 = vst [vmem:[%s579 + $0x18] sm:$0xff] %v1175
        %s1180 = sand.u32 %s362, 1
        %s1181 = scalar_lea.sflag [#allocation4], %s1180
        %s1182 = sand.u32 %s362, 1
        %s1183 = smul.addr %s1182, 32
        %s1184 = scalar_lea.vmem [#allocation11], %s1183
        // Predicated region
        $region101: #{tpu_custom_call.1} parent=79 // pred_check
          %p1185 = pneg %p372
        $region102: #{tpu_custom_call.1} parent=79 // pred_check_branch
          %1187 = sbr.rel (%p1185) target = $region104
        $region103: #{tpu_custom_call.1} parent=79 // pred_region
          %s1188 = smul.u32 2, %s34
          %1190 = vsyncadd %s1181, 0
          %s1191 = smul.addr %s1188, 2
          %s1192 = smul.addr %s1191, 8
          %s1193 = scalar_lea.hbm %s15, %s1192
          %s1194 = sshll.u32 %s1184, 4
          %s1195 = int_to_ptr.vmem [resolvable:$true] %s1194
          %s1196 = sshll.u32 %s1193, 4
          %s1197 = int_to_ptr.hbm [resolvable:$true] %s1196
          %1202 = dma.vmem_to_hbm [thread:$0]  %s1195, 512, %s1197, %s1181, 256, 256, 16
        $region104: #{tpu_custom_call.1} parent=79 // pred_fallthru
          _
      $region80: #{tpu_custom_call.1} parent=5 // pred_fallthru
        _
      %p1203 = scmp.le.s32.totalorder 2, %s29
      // Predicated region
      $region105: #{tpu_custom_call.1} parent=5 // pred_check
        %p1204 = pneg %p1203
      $region106: #{tpu_custom_call.1} parent=5 // pred_check_branch
        %1206 = sbr.rel (%p1204) target = $region108
      $region107: #{tpu_custom_call.1} parent=5 // pred_region
        %s1207 = ssub.s32 %s29, 2
        // Predicated region
        $region109: #{tpu_custom_call.1} parent=107 // pred_check
          %p1208 = pneg %p378
        $region110: #{tpu_custom_call.1} parent=107 // pred_check_branch
          %1210 = sbr.rel (%p1208) target = $region112
        $region111: #{tpu_custom_call.1} parent=107 // pred_region
          %s1211 = sand.u32 %s363, 1
          %s1212 = scalar_lea.sflag [#allocation4], %s1211
          %s1213 = sand.u32 %s363, 1
          %s1214 = smul.addr %s1213, 32
          %s1215 = scalar_lea.vmem [#allocation11], %s1214
          %1217 = dma.done %s1212, 512
        $region112: #{tpu_custom_call.1} parent=107 // pred_fallthru
          _
      $region108: #{tpu_custom_call.1} parent=5 // pred_fallthru
        _
    $region6: #{tpu_custom_call.1} parent=1 // loop_footer
      %s33 = sadd.s32 1, %s29
    $region7: #{tpu_custom_call.1} parent=1 // loop_footer_branch
      %28 = sbr.rel target = $region3
    $region8: #{tpu_custom_call.1} parent=1 // loop_exit
      _
    %1218 = vsyncpa [#allocation3], 1
    %s1219 = scalar_lea.sflag [#allocation3], 1
    %1220 = vsyncpa %s1219, 1
    %1221 = vsyncpa [#allocation6], 1
    %1222 = vsyncpa [#allocation9], 1
    %1223 = vsyncpa [#allocation4], 1
    %s1224 = scalar_lea.sflag [#allocation4], 1
    %1225 = vsyncpa %s1224, 1

</llo_original>
